<compile_context>
chip_gen: v7x
topology: tpu7x:2x2x1
jax: 0.10.0
libtpu: 0.0.40
codegen_flags: <defaults>
</compile_context>

<pallas_src>
import math

import jax
import jax.numpy as jnp
from jax import lax
from jax.experimental import pallas as pl
from jax.experimental.pallas import tpu as pltpu

# ---- module hyper-parameters (defaults of the PyTorch module, scaled down) ----
HIDDEN = 32
NUM_HEADS = 4
EXPAND_K = 1.0
EXPAND_V = 2.0
KEY_DIM = int(HIDDEN * EXPAND_K)        # 32
VALUE_DIM = int(HIDDEN * EXPAND_V)      # 64
HEAD_QK = KEY_DIM // NUM_HEADS          # 8   (<= 256, as asserted in the module)
HEAD_V = VALUE_DIM // NUM_HEADS         # 16
NORM_EPS = 1e-5
ROPE_BASE = 10000.0


# ------------------------------- Pallas kernel ------------------------------------
def msr_kernel(x_ref, w_ref, cos_ref, sin_ref, kmsk_ref, dmsk_ref,
               vmsk_ref, avg_ref, rmsw_ref, wo_ref, o_ref):
    """Fused MultiScaleRetention forward for one batch tile.

    x_ref   : (R, D)             flattened (batch_tile * T, hidden)
    w_ref   : (D, 4K + 2V)       [Wq*s | (Wq*s)P | Wk | Wk P | Wv | Wg]
    cos/sin : (R, K)             full-width RoPE tables (sin already sign-folded)
    kmsk    : (H*R, K)           head selector for the expanded K slab
    dmsk    : (R, H*R)           block-diagonal causal-decay mask (per batch & head)
    vmsk    : (H*R, V)           head selector for the expanded V slab
    avg     : (V, V)             block-diagonal 1/HEAD_V averaging matrix (RMS stats)
    rmsw    : (1, V)             RMSNorm weight tiled per head
    wo      : (V, D)             output projection
    """
    K, V = KEY_DIM, VALUE_DIM

    # single fused q/k/qswap/kswap/v/g projection
    proj = jnp.dot(x_ref[...], w_ref[...], preferred_element_type=jnp.float32)   # (R, 256)

    cos = cos_ref[...]
    sin = sin_ref[...]
    # RoPE: rotate-half was folded into the weight columns -> two full-width FMAs.
    q = proj[:, 0 * K:1 * K] * cos + proj[:, 1 * K:2 * K] * sin     # (R, K), scale pre-folded
    k = proj[:, 2 * K:3 * K] * cos + proj[:, 3 * K:4 * K] * sin     # (R, K)
    v = proj[:, 4 * K:4 * K + V]                                    # (R, V)
    g = proj[:, 4 * K + V:4 * K + 2 * V]                            # (R, V)

    # head-expanded slabs: row block h carries only head h's features (others zeroed).
    ke = jnp.concatenate([k] * NUM_HEADS, axis=0) * kmsk_ref[...]   # (H*R, K)
    ve = jnp.concatenate([v] * NUM_HEADS, axis=0) * vmsk_ref[...]   # (H*R, V)

    # retention scores for all (head, batch) blocks at once: S[r, h*R + r'] = q_h[r].k_h[r']
    s = lax.dot_general(q, ke, (((1,), (1,)), ((), ())),
                        preferred_element_type=jnp.float32)         # (R, H*R)
    s = s * dmsk_ref[...]                                           # causal decay + block structure
    o = jnp.dot(s, ve, preferred_element_type=jnp.float32)          # (R, V) == fused_recurrent

    # FusedRMSNormSwishGate: per-(row, head) mean-square via a constant block-avg matmul.
    ms = jnp.dot(o * o, avg_ref[...], preferred_element_type=jnp.float32)
    o = o * lax.rsqrt(ms + NORM_EPS) * rmsw_ref[...]
    o = o * g * jax.nn.sigmoid(g)

    # output projection, single (R, D) store
    o_ref[...] = jnp.dot(o, wo_ref[...], preferred_element_type=jnp.float32)


# ---------------------------- host-side constant builders --------------------------
def _rotate_half_perm():
    """Column permutation implementing per-head rotate-half (folded into Wq/Wk)."""
    c = jnp.arange(KEY_DIM)
    return (c // HEAD_QK) * HEAD_QK + ((c % HEAD_QK) + HEAD_QK // 2) % HEAD_QK


def _rope_tables_full(bb, T):
    """cos/sin at full q/k width for a (bb*T)-row block; sin carries the rotate-half sign."""
    half = HEAD_QK // 2
    inv_freq = 1.0 / (ROPE_BASE ** (jnp.arange(0, HEAD_QK, 2, dtype=jnp.float32) / HEAD_QK))
    t = jnp.arange(T, dtype=jnp.float32)
    freqs = jnp.outer(t, inv_freq)                                   # (T, half)
    c = jnp.arange(KEY_DIM)
    f = c % half
    sign = jnp.where((c % HEAD_QK) < half, -1.0, 1.0)
    cos = jnp.cos(freqs)[:, f]                                       # (T, KEY_DIM)
    sin = jnp.sin(freqs)[:, f] * sign[None, :]
    return jnp.tile(cos, (bb, 1)), jnp.tile(sin, (bb, 1))            # (bb*T, KEY_DIM)


def _head_row_mask(bb, T, width, head_width):
    """(H*R, width) selector: row block h keeps only head h's columns."""
    R = bb * T
    row_head = jnp.arange(NUM_HEADS * R) // R
    col_head = jnp.arange(width) // head_width
    return (row_head[:, None] == col_head[None, :]).astype(jnp.float32)


def _expanded_decay_mask(bb, T):
    """(R, H*R): delta(batch) * [t>=s] * decay_h^(t-s); zero outside own batch/head block."""
    R = bb * T
    r = jnp.arange(R)
    b = r // T
    t = r % T
    hc = jnp.arange(NUM_HEADS * R)
    h = hc // R
    rp = hc % R
    bp = rp // T
    s = rp % T
    decay = 1.0 - jnp.exp2(-5.0 - h.astype(jnp.float32))             # per-head retention decay
    diff = (t[:, None] - s[None, :]).astype(jnp.float32)
    valid = (b[:, None] == bp[None, :]) & (t[:, None] >= s[None, :])
    return jnp.where(valid, decay[None, :] ** diff, 0.0)


def _block_avg_mat():
    ch = jnp.arange(VALUE_DIM) // HEAD_V
    return (ch[:, None] == ch[None, :]).astype(jnp.float32) / HEAD_V


# ------------------------------- host-side wrapper ---------------------------------
def multiscale_retention(x, wq, wk, wv, wg, wo, rmsw, *, batch_tile=None):
    """x: (B, T, D); w*: (in, out) matrices; rmsw: (HEAD_V,). Returns (B, T, D)."""
    B, T, D = x.shape
    bb = B if batch_tile is None else batch_tile    # batch_tile=B//2 -> shard across v7x's 2 TCs
    assert B % bb == 0
    R = bb * T

    # one-time parameter folds: q scale + rotate-half permutation baked into the fused weight
    scale = HEAD_QK ** -0.5
    perm = _rotate_half_perm()
    wq_s = wq * scale
    w_big = jnp.concatenate([wq_s, wq_s[:, perm], wk, wk[:, perm], wv, wg], axis=1)
    wb = w_big.shape[1]                                              # 4*KEY_DIM + 2*VALUE_DIM

    cos_f, sin_f = _rope_tables_full(bb, T)
    kmsk = _head_row_mask(bb, T, KEY_DIM, HEAD_QK)
    vmsk = _head_row_mask(bb, T, VALUE_DIM, HEAD_V)
    dmsk = _expanded_decay_mask(bb, T)
    avg = _block_avg_mat()
    rmsw_f = jnp.tile(rmsw.reshape(1, HEAD_V), (1, NUM_HEADS))       # (1, VALUE_DIM)

    x2 = x.reshape(B * T, D)

    out = pl.pallas_call(
        msr_kernel,
        out_shape=jax.ShapeDtypeStruct((B * T, D), jnp.float32),
        grid=(B // bb,),
        in_specs=[
            pl.BlockSpec((R, D), lambda i: (i, 0)),                      # hidden_states tile
            pl.BlockSpec((D, wb), lambda i: (0, 0)),                     # fused projection W
            pl.BlockSpec((R, KEY_DIM), lambda i: (0, 0)),                # rope cos
            pl.BlockSpec((R, KEY_DIM), lambda i: (0, 0)),                # rope sin (signed)
            pl.BlockSpec((NUM_HEADS * R, KEY_DIM), lambda i: (0, 0)),    # K head selector
            pl.BlockSpec((R, NUM_HEADS * R), lambda i: (0, 0)),          # causal decay mask
            pl.BlockSpec((NUM_HEADS * R, VALUE_DIM), lambda i: (0, 0)),  # V head selector
            pl.BlockSpec((VALUE_DIM, VALUE_DIM), lambda i: (0, 0)),      # RMS block-average
            pl.BlockSpec((1, VALUE_DIM), lambda i: (0, 0)),              # RMSNorm weight
            pl.BlockSpec((VALUE_DIM, D), lambda i: (0, 0)),              # Wo
        ],
        out_specs=pl.BlockSpec((R, D), lambda i: (i, 0)),
        compiler_params=pltpu.CompilerParams(dimension_semantics=("parallel",)),
    )(x2, w_big, cos_f, sin_f, kmsk, dmsk, vmsk, avg, rmsw_f, wo)

    return out.reshape(B, T, D)


# ------------------------------ pure-JAX reference ---------------------------------
def reference(x, wq, wk, wv, wg, wo, rmsw_vec):
    B, T, D = x.shape
    q = (x @ wq).reshape(B, T, NUM_HEADS, HEAD_QK)
    k = (x @ wk).reshape(B, T, NUM_HEADS, HEAD_QK)
    v = (x @ wv).reshape(B, T, NUM_HEADS, HEAD_V)
    g = (x @ wg).reshape(B, T, NUM_HEADS, HEAD_V)

    half = HEAD_QK // 2
    inv_freq = 1.0 / (ROPE_BASE ** (jnp.arange(0, HEAD_QK, 2, dtype=jnp.float32) / HEAD_QK))
    t = jnp.arange(T, dtype=jnp.float32)
    freqs = jnp.outer(t, inv_freq)
    cos = jnp.cos(freqs)[None, :, None, :]
    sin = jnp.sin(freqs)[None, :, None, :]
    q1, q2 = q[..., :half], q[..., half:]
    q = jnp.concatenate([q1 * cos - q2 * sin, q2 * cos + q1 * sin], axis=-1)
    k1, k2 = k[..., :half], k[..., half:]
    k = jnp.concatenate([k1 * cos - k2 * sin, k2 * cos + k1 * sin], axis=-1)

    decay = 1.0 - jnp.exp2(-5.0 - jnp.arange(NUM_HEADS, dtype=jnp.float32))
    tt = jnp.arange(T)
    diff = (tt[:, None] - tt[None, :]).astype(jnp.float32)
    dmask = jnp.where((diff >= 0)[None], decay[:, None, None] ** diff[None], 0.0)  # (H,T,T)

    scale = HEAD_QK ** -0.5
    s = jnp.einsum('bthk,bshk->bhts', q * scale, k) * dmask[None]
    o = jnp.einsum('bhts,bshd->bthd', s, v)
    ms = jnp.mean(o * o, axis=-1, keepdims=True)
    o = o * lax.rsqrt(ms + NORM_EPS) * rmsw_vec
    o = o * g * jax.nn.sigmoid(g)
    return o.reshape(B, T, VALUE_DIM) @ wo


# ----------------------------------- main ------------------------------------------
def _xavier_uniform(key, fan_in, fan_out, gain):
    limit = gain * math.sqrt(6.0 / (fan_in + fan_out))
    return jax.random.uniform(key, (fan_in, fan_out), jnp.float32, -limit, limit)


if __name__ == "__main__":
    B, T = 2, 8
    key = jax.random.PRNGKey(0)
    kx, kq, kk, kv, kg, ko = jax.random.split(key, 6)
    gain = 2.0 ** (-2.5)

    x = jax.random.normal(kx, (B, T, HIDDEN), jnp.float32)
    # nn.Linear stores (out, in); we keep the transposed (in, out) matrices directly.
    wq = _xavier_uniform(kq, HIDDEN, KEY_DIM, gain)
    wk = _xavier_uniform(kk, HIDDEN, KEY_DIM, gain)
    wv = _xavier_uniform(kv, HIDDEN, VALUE_DIM, gain)
    wg = _xavier_uniform(kg, HIDDEN, VALUE_DIM, gain)
    wo = _xavier_uniform(ko, VALUE_DIM, HIDDEN, gain)
    rmsw = jnp.ones((HEAD_V,), jnp.float32)   # RMSNorm weight (elementwise_affine=True)

    out = multiscale_retention(x, wq, wk, wv, wg, wo, rmsw)
    out = jax.block_until_ready(out)

    ref = reference(x, wq, wk, wv, wg, wo, rmsw)
    assert out.shape == (B, T, HIDDEN), out.shape
    max_err = float(jnp.max(jnp.abs(out - ref)))
    assert jnp.allclose(out, ref, atol=1e-3, rtol=1e-3), f"max abs err {max_err}"

    print("KERNEL_OK")
</pallas_src>

<mosaic_0001>
module attributes {stable_mosaic.version = 11 : i64} {
  func.func @msr_kernel(%arg0: i32, %arg1: memref<16x32xf32, #tpu.memory_space<vmem>>, %arg2: memref<32x256xf32, #tpu.memory_space<vmem>>, %arg3: memref<16x32xf32, #tpu.memory_space<vmem>>, %arg4: memref<16x32xf32, #tpu.memory_space<vmem>>, %arg5: memref<64x32xf32, #tpu.memory_space<vmem>>, %arg6: memref<16x64xf32, #tpu.memory_space<vmem>>, %arg7: memref<64x64xf32, #tpu.memory_space<vmem>>, %arg8: memref<64x64xf32, #tpu.memory_space<vmem>>, %arg9: memref<1x64xf32, #tpu.memory_space<vmem>>, %arg10: memref<64x32xf32, #tpu.memory_space<vmem>>, %arg11: memref<16x32xf32, #tpu.memory_space<vmem>>) attributes {dimension_semantics = [#tpu.dimension_semantics<parallel>], iteration_bounds = array<i64: 1>, scalar_prefetch = 0 : i64, scratch_operands = 0 : i64, tpu.core_type = #tpu.core_type<tc>, window_params = [{transform_indices = @transform_0, window_bounds = array<i64: 16, 32>}, {pipeline_mode = #tpu.pipeline_mode<synchronous>, transform_indices = @transform_1, window_bounds = array<i64: 32, 256>}, {pipeline_mode = #tpu.pipeline_mode<synchronous>, transform_indices = @transform_2, window_bounds = array<i64: 16, 32>}, {pipeline_mode = #tpu.pipeline_mode<synchronous>, transform_indices = @transform_3, window_bounds = array<i64: 16, 32>}, {pipeline_mode = #tpu.pipeline_mode<synchronous>, transform_indices = @transform_4, window_bounds = array<i64: 64, 32>}, {pipeline_mode = #tpu.pipeline_mode<synchronous>, transform_indices = @transform_5, window_bounds = array<i64: 16, 64>}, {pipeline_mode = #tpu.pipeline_mode<synchronous>, transform_indices = @transform_6, window_bounds = array<i64: 64, 64>}, {pipeline_mode = #tpu.pipeline_mode<synchronous>, transform_indices = @transform_7, window_bounds = array<i64: 64, 64>}, {pipeline_mode = #tpu.pipeline_mode<synchronous>, transform_indices = @transform_8, window_bounds = array<i64: 1, 64>}, {pipeline_mode = #tpu.pipeline_mode<synchronous>, transform_indices = @transform_9, window_bounds = array<i64: 64, 32>}, {transform_indices = @transform_10, window_bounds = array<i64: 16, 32>}]} {
    %c0 = arith.constant 0 : index
    %c0_0 = arith.constant 0 : index
    %0 = vector.load %arg1[%c0, %c0_0] : memref<16x32xf32, #tpu.memory_space<vmem>>, vector<16x32xf32>
    %c0_1 = arith.constant 0 : index
    %c0_2 = arith.constant 0 : index
    %1 = vector.load %arg2[%c0_1, %c0_2] : memref<32x256xf32, #tpu.memory_space<vmem>>, vector<32x256xf32>
    %cst = arith.constant dense<0.000000e+00> : vector<16x256xf32>
    %2 = tpu.matmul %0, %1, %cst {dimension_numbers = #tpu.dot_dimension_numbers<[1], [0], [0], [1], [0, 0, 1, 1], [], []>} : vector<16x32xf32>, vector<32x256xf32>, vector<16x256xf32> -> vector<16x256xf32>
    %c0_3 = arith.constant 0 : index
    %c0_4 = arith.constant 0 : index
    %3 = vector.load %arg3[%c0_3, %c0_4] : memref<16x32xf32, #tpu.memory_space<vmem>>, vector<16x32xf32>
    %c0_5 = arith.constant 0 : index
    %c0_6 = arith.constant 0 : index
    %4 = vector.load %arg4[%c0_5, %c0_6] : memref<16x32xf32, #tpu.memory_space<vmem>>, vector<16x32xf32>
    %5 = vector.extract_strided_slice %2 {offsets = [0, 0], sizes = [16, 32], strides = [1, 1]} : vector<16x256xf32> to vector<16x32xf32>
    %6 = arith.mulf %5, %3 : vector<16x32xf32>
    %7 = vector.extract_strided_slice %2 {offsets = [0, 32], sizes = [16, 32], strides = [1, 1]} : vector<16x256xf32> to vector<16x32xf32>
    %8 = arith.mulf %7, %4 : vector<16x32xf32>
    %9 = arith.addf %6, %8 : vector<16x32xf32>
    %10 = vector.extract_strided_slice %2 {offsets = [0, 64], sizes = [16, 32], strides = [1, 1]} : vector<16x256xf32> to vector<16x32xf32>
    %11 = arith.mulf %10, %3 : vector<16x32xf32>
    %12 = vector.extract_strided_slice %2 {offsets = [0, 96], sizes = [16, 32], strides = [1, 1]} : vector<16x256xf32> to vector<16x32xf32>
    %13 = arith.mulf %12, %4 : vector<16x32xf32>
    %14 = arith.addf %11, %13 : vector<16x32xf32>
    %15 = vector.extract_strided_slice %2 {offsets = [0, 128], sizes = [16, 64], strides = [1, 1]} : vector<16x256xf32> to vector<16x64xf32>
    %16 = vector.extract_strided_slice %2 {offsets = [0, 192], sizes = [16, 64], strides = [1, 1]} : vector<16x256xf32> to vector<16x64xf32>
    %17 = tpu.concatenate %14, %14, %14, %14 in 0 : vector<16x32xf32>, vector<16x32xf32>, vector<16x32xf32>, vector<16x32xf32> -> vector<64x32xf32>
    %c0_7 = arith.constant 0 : index
    %c0_8 = arith.constant 0 : index
    %18 = vector.load %arg5[%c0_7, %c0_8] : memref<64x32xf32, #tpu.memory_space<vmem>>, vector<64x32xf32>
    %19 = arith.mulf %17, %18 : vector<64x32xf32>
    %20 = tpu.concatenate %15, %15, %15, %15 in 0 : vector<16x64xf32>, vector<16x64xf32>, vector<16x64xf32>, vector<16x64xf32> -> vector<64x64xf32>
    %c0_9 = arith.constant 0 : index
    %c0_10 = arith.constant 0 : index
    %21 = vector.load %arg7[%c0_9, %c0_10] : memref<64x64xf32, #tpu.memory_space<vmem>>, vector<64x64xf32>
    %22 = arith.mulf %20, %21 : vector<64x64xf32>
    %cst_11 = arith.constant dense<0.000000e+00> : vector<16x64xf32>
    %23 = tpu.matmul %9, %19, %cst_11 {dimension_numbers = #tpu.dot_dimension_numbers<[1], [1], [0], [0], [0, 0, 1, 0], [], []>} : vector<16x32xf32>, vector<64x32xf32>, vector<16x64xf32> -> vector<16x64xf32>
    %c0_12 = arith.constant 0 : index
    %c0_13 = arith.constant 0 : index
    %24 = vector.load %arg6[%c0_12, %c0_13] : memref<16x64xf32, #tpu.memory_space<vmem>>, vector<16x64xf32>
    %25 = arith.mulf %23, %24 : vector<16x64xf32>
    %cst_14 = arith.constant dense<0.000000e+00> : vector<16x64xf32>
    %26 = tpu.matmul %25, %22, %cst_14 {dimension_numbers = #tpu.dot_dimension_numbers<[1], [0], [0], [1], [0, 0, 1, 1], [], []>} : vector<16x64xf32>, vector<64x64xf32>, vector<16x64xf32> -> vector<16x64xf32>
    %27 = arith.mulf %26, %26 : vector<16x64xf32>
    %c0_15 = arith.constant 0 : index
    %c0_16 = arith.constant 0 : index
    %28 = vector.load %arg8[%c0_15, %c0_16] : memref<64x64xf32, #tpu.memory_space<vmem>>, vector<64x64xf32>
    %cst_17 = arith.constant dense<0.000000e+00> : vector<16x64xf32>
    %29 = tpu.matmul %27, %28, %cst_17 {dimension_numbers = #tpu.dot_dimension_numbers<[1], [0], [0], [1], [0, 0, 1, 1], [], []>} : vector<16x64xf32>, vector<64x64xf32>, vector<16x64xf32> -> vector<16x64xf32>
    %cst_18 = arith.constant 9.99999974E-6 : f32
    %30 = vector.broadcast %cst_18 : f32 to vector<16x64xf32>
    %31 = arith.addf %29, %30 : vector<16x64xf32>
    %32 = math.rsqrt %31 : vector<16x64xf32>
    %33 = arith.mulf %26, %32 : vector<16x64xf32>
    %c0_19 = arith.constant 0 : index
    %c0_20 = arith.constant 0 : index
    %34 = vector.load %arg9[%c0_19, %c0_20] : memref<1x64xf32, #tpu.memory_space<vmem>>, vector<1x64xf32>
    %35 = vector.broadcast %34 : vector<1x64xf32> to vector<16x64xf32>
    %36 = arith.mulf %33, %35 : vector<16x64xf32>
    %37 = arith.mulf %36, %16 : vector<16x64xf32>
    %38 = arith.negf %16 : vector<16x64xf32>
    %39 = math.exp %38 : vector<16x64xf32>
    %cst_21 = arith.constant 1.000000e+00 : f32
    %40 = vector.broadcast %cst_21 : f32 to vector<16x64xf32>
    %41 = arith.addf %40, %39 : vector<16x64xf32>
    %42 = arith.divf %40, %41 : vector<16x64xf32>
    %43 = arith.mulf %37, %42 : vector<16x64xf32>
    %c0_22 = arith.constant 0 : index
    %c0_23 = arith.constant 0 : index
    %44 = vector.load %arg10[%c0_22, %c0_23] : memref<64x32xf32, #tpu.memory_space<vmem>>, vector<64x32xf32>
    %cst_24 = arith.constant dense<0.000000e+00> : vector<16x32xf32>
    %45 = tpu.matmul %43, %44, %cst_24 {dimension_numbers = #tpu.dot_dimension_numbers<[1], [0], [0], [1], [0, 0, 1, 1], [], []>} : vector<16x64xf32>, vector<64x32xf32>, vector<16x32xf32> -> vector<16x32xf32>
    %c0_25 = arith.constant 0 : index
    %c0_26 = arith.constant 0 : index
    %46 = vector.load %arg11[%c0_25, %c0_26] : memref<16x32xf32, #tpu.memory_space<vmem>>, vector<16x32xf32>
    tpu.vector_store %arg11[%c0_25, %c0_26], %45 {strides = array<i32>} : memref<16x32xf32, #tpu.memory_space<vmem>>, vector<16x32xf32>,
    return
  }
  func.func @transform_0(%arg0: i32) -> (i32, i32) {
    %c0_i32 = arith.constant 0 : i32
    %c0_i32_0 = arith.constant 0 : i32
    return %arg0, %c0_i32 : i32, i32
  }
  func.func @transform_1(%arg0: i32) -> (i32, i32) {
    %c0_i32 = arith.constant 0 : i32
    %c0_i32_0 = arith.constant 0 : i32
    %c0_i32_1 = arith.constant 0 : i32
    return %c0_i32, %c0_i32_0 : i32, i32
  }
  func.func @transform_2(%arg0: i32) -> (i32, i32) {
    %c0_i32 = arith.constant 0 : i32
    %c0_i32_0 = arith.constant 0 : i32
    %c0_i32_1 = arith.constant 0 : i32
    return %c0_i32, %c0_i32_0 : i32, i32
  }
  func.func @transform_3(%arg0: i32) -> (i32, i32) {
    %c0_i32 = arith.constant 0 : i32
    %c0_i32_0 = arith.constant 0 : i32
    %c0_i32_1 = arith.constant 0 : i32
    return %c0_i32, %c0_i32_0 : i32, i32
  }
  func.func @transform_4(%arg0: i32) -> (i32, i32) {
    %c0_i32 = arith.constant 0 : i32
    %c0_i32_0 = arith.constant 0 : i32
    %c0_i32_1 = arith.constant 0 : i32
    return %c0_i32, %c0_i32_0 : i32, i32
  }
  func.func @transform_5(%arg0: i32) -> (i32, i32) {
    %c0_i32 = arith.constant 0 : i32
    %c0_i32_0 = arith.constant 0 : i32
    %c0_i32_1 = arith.constant 0 : i32
    return %c0_i32, %c0_i32_0 : i32, i32
  }
  func.func @transform_6(%arg0: i32) -> (i32, i32) {
    %c0_i32 = arith.constant 0 : i32
    %c0_i32_0 = arith.constant 0 : i32
    %c0_i32_1 = arith.constant 0 : i32
    return %c0_i32, %c0_i32_0 : i32, i32
  }
  func.func @transform_7(%arg0: i32) -> (i32, i32) {
    %c0_i32 = arith.constant 0 : i32
    %c0_i32_0 = arith.constant 0 : i32
    %c0_i32_1 = arith.constant 0 : i32
    return %c0_i32, %c0_i32_0 : i32, i32
  }
  func.func @transform_8(%arg0: i32) -> (i32, i32) {
    %c0_i32 = arith.constant 0 : i32
    %c0_i32_0 = arith.constant 0 : i32
    %c0_i32_1 = arith.constant 0 : i32
    return %c0_i32, %c0_i32_0 : i32, i32
  }
  func.func @transform_9(%arg0: i32) -> (i32, i32) {
    %c0_i32 = arith.constant 0 : i32
    %c0_i32_0 = arith.constant 0 : i32
    %c0_i32_1 = arith.constant 0 : i32
    return %c0_i32, %c0_i32_0 : i32, i32
  }
  func.func @transform_10(%arg0: i32) -> (i32, i32) {
    %c0_i32 = arith.constant 0 : i32
    %c0_i32_0 = arith.constant 0 : i32
    return %arg0, %c0_i32 : i32, i32
  }
}

</mosaic_0001>

<llo_original>
// kernel: tpu_custom_call.1
$region0: #{tpu_custom_call.1}
  #allocation0 [shape = 'u32[]', space=smem, size = 0x4, offset = 0x4, fixed_abs, tag = 'smem constant byte address 0x4 - core index']
  #allocation1 [shape = 'u32[144,128]{1,0:T(1,128)}', space=vmem, size = 0x12000, scoped, tag = 'internal scratch']
  %s0 = inlined_call_operand.hbm [shape: f32[16,32], index: 0, kind: input, shape index: {}]
  %s1 = inlined_call_operand.vmem [shape: f32[32,256], index: 1, kind: input, shape index: {}]
  %s2 = inlined_call_operand.hbm [shape: f32[16,32], index: 2, kind: input, shape index: {}]
  %s3 = inlined_call_operand.hbm [shape: f32[16,32], index: 3, kind: input, shape index: {}]
  %s4 = inlined_call_operand.vmem [shape: f32[64,32], index: 4, kind: input, shape index: {}]
  %s5 = inlined_call_operand.hbm [shape: f32[16,64], index: 5, kind: input, shape index: {}]
  %s6 = inlined_call_operand.vmem [shape: f32[64,64], index: 6, kind: input, shape index: {}]
  %s7 = inlined_call_operand.vmem [shape: f32[64,64], index: 7, kind: input, shape index: {}]
  %s8 = inlined_call_operand.vmem [shape: f32[1,64], index: 8, kind: input, shape index: {}]
  %s9 = inlined_call_operand.vmem [shape: f32[64,32], index: 9, kind: input, shape index: {}]
  %s10 = inlined_call_operand.hbm [shape: f32[16,32], index: 10, kind: output, shape index: {}]
  %s11 = sld [smem:[#allocation0]]
  $region66: #{tpu_custom_call.1} parent=0
    _
  %s13 = ssub.s32 1, %s11
  %s14 = scalar_select 0, %s13, %s11
  $region1: #{tpu_custom_call.1} parent=0
    #allocation2 [shape = 'u8[8192]{0}', space=vmem, size = 0x2000, scoped, tag = 'input window, operand 0, single buffered']
    #allocation3 [shape = 's32[1]{0}', space=sflag, size = 0x4, scoped, tag = 'scoped memory for tpu_custom_call.1']
    #allocation4 [shape = 's32[1]{0}', space=sflag, size = 0x4, scoped, tag = 'scoped memory for tpu_custom_call.1']
    #allocation5 [shape = 'u8[8192]{0}', space=vmem, size = 0x2000, scoped, tag = 'input window, operand 2, single buffered']
    #allocation6 [shape = 's32[1]{0}', space=sflag, size = 0x4, scoped, tag = 'scoped memory for tpu_custom_call.1']
    #allocation7 [shape = 'u8[8192]{0}', space=vmem, size = 0x2000, scoped, tag = 'input window, operand 3, single buffered']
    #allocation8 [shape = 'u8[8192]{0}', space=vmem, size = 0x2000, scoped, tag = 'input window, operand 5, single buffered']
    #allocation9 [shape = 's32[1]{0}', space=sflag, size = 0x4, scoped, tag = 'scoped memory for tpu_custom_call.1']
    #allocation10 [shape = 'u8[8192]{0}', space=vmem, size = 0x2000, scoped, tag = 'output window, operand 0, single buffered']
    %15 = vsyncpa [#allocation3], 0
    %16 = vsyncpa [#allocation6], 0
    %17 = vsyncpa [#allocation9], 0
    %18 = vsyncpa [#allocation4], 0
    // Predicated region
    $region2: #{tpu_custom_call.1} parent=1 // pred_check
      _
    $region3: #{tpu_custom_call.1} parent=1 // pred_check_branch
      %20 = sbr.rel (0) target = $region5
    $region4: #{tpu_custom_call.1} parent=1 // pred_region
      %s22 = ssub.s32 256, 256
      %23 = vsyncadd [#allocation3], %s22
      %s24 = sshll.u32 [#allocation2], 4
      %s25 = int_to_ptr.vmem [resolvable:$true] %s24
      %30 = dma.hbm_to_vmem [thread:$0]  %s0, 256, %s25, [#allocation3], 128, 128, 8
    $region5: #{tpu_custom_call.1} parent=1 // pred_fallthru
      _
    // Predicated region
    $region6: #{tpu_custom_call.1} parent=1 // pred_check
      _
    $region7: #{tpu_custom_call.1} parent=1 // pred_check_branch
      %32 = sbr.rel (0) target = $region9
    $region8: #{tpu_custom_call.1} parent=1 // pred_region
      _
    $region9: #{tpu_custom_call.1} parent=1 // pred_fallthru
      _
    // Predicated region
    $region10: #{tpu_custom_call.1} parent=1 // pred_check
      _
    $region11: #{tpu_custom_call.1} parent=1 // pred_check_branch
      %34 = sbr.rel (0) target = $region13
    $region12: #{tpu_custom_call.1} parent=1 // pred_region
      %s36 = ssub.s32 256, 256
      %37 = vsyncadd [#allocation6], %s36
      %s38 = sshll.u32 [#allocation5], 4
      %s39 = int_to_ptr.vmem [resolvable:$true] %s38
      %44 = dma.hbm_to_vmem [thread:$0]  %s2, 256, %s39, [#allocation6], 128, 128, 8
    $region13: #{tpu_custom_call.1} parent=1 // pred_fallthru
      _
    // Predicated region
    $region14: #{tpu_custom_call.1} parent=1 // pred_check
      _
    $region15: #{tpu_custom_call.1} parent=1 // pred_check_branch
      %46 = sbr.rel (0) target = $region17
    $region16: #{tpu_custom_call.1} parent=1 // pred_region
      %s48 = ssub.s32 256, 256
      %49 = vsyncadd [#allocation6], %s48
      %s50 = sshll.u32 [#allocation7], 4
      %s51 = int_to_ptr.vmem [resolvable:$true] %s50
      %56 = dma.hbm_to_vmem [thread:$0]  %s3, 256, %s51, [#allocation6], 128, 128, 8
    $region17: #{tpu_custom_call.1} parent=1 // pred_fallthru
      _
    // Predicated region
    $region18: #{tpu_custom_call.1} parent=1 // pred_check
      _
    $region19: #{tpu_custom_call.1} parent=1 // pred_check_branch
      %58 = sbr.rel (0) target = $region21
    $region20: #{tpu_custom_call.1} parent=1 // pred_region
      _
    $region21: #{tpu_custom_call.1} parent=1 // pred_fallthru
      _
    // Predicated region
    $region22: #{tpu_custom_call.1} parent=1 // pred_check
      _
    $region23: #{tpu_custom_call.1} parent=1 // pred_check_branch
      %60 = sbr.rel (0) target = $region25
    $region24: #{tpu_custom_call.1} parent=1 // pred_region
      %s62 = ssub.s32 256, 256
      %63 = vsyncadd [#allocation9], %s62
      %s64 = sshll.u32 [#allocation8], 4
      %s65 = int_to_ptr.vmem [resolvable:$true] %s64
      %70 = dma.hbm_to_vmem [thread:$0]  %s5, 256, %s65, [#allocation9], 128, 128, 8
    $region25: #{tpu_custom_call.1} parent=1 // pred_fallthru
      _
    // Predicated region
    $region26: #{tpu_custom_call.1} parent=1 // pred_check
      _
    $region27: #{tpu_custom_call.1} parent=1 // pred_check_branch
      %72 = sbr.rel (0) target = $region29
    $region28: #{tpu_custom_call.1} parent=1 // pred_region
      _
    $region29: #{tpu_custom_call.1} parent=1 // pred_fallthru
      _
    // Predicated region
    $region30: #{tpu_custom_call.1} parent=1 // pred_check
      _
    $region31: #{tpu_custom_call.1} parent=1 // pred_check_branch
      %74 = sbr.rel (0) target = $region33
    $region32: #{tpu_custom_call.1} parent=1 // pred_region
      _
    $region33: #{tpu_custom_call.1} parent=1 // pred_fallthru
      _
    // Predicated region
    $region34: #{tpu_custom_call.1} parent=1 // pred_check
      _
    $region35: #{tpu_custom_call.1} parent=1 // pred_check_branch
      %76 = sbr.rel (0) target = $region37
    $region36: #{tpu_custom_call.1} parent=1 // pred_region
      _
    $region37: #{tpu_custom_call.1} parent=1 // pred_fallthru
      _
    // Predicated region
    $region38: #{tpu_custom_call.1} parent=1 // pred_check
      _
    $region39: #{tpu_custom_call.1} parent=1 // pred_check_branch
      %78 = sbr.rel (0) target = $region41
    $region40: #{tpu_custom_call.1} parent=1 // pred_region
      _
    $region41: #{tpu_custom_call.1} parent=1 // pred_fallthru
      _
    // Predicated region
    $region42: #{tpu_custom_call.1} parent=1 // pred_check
      _
    $region43: #{tpu_custom_call.1} parent=1 // pred_check_branch
      %80 = sbr.rel (0) target = $region45
    $region44: #{tpu_custom_call.1} parent=1 // pred_region
      %81 = dma.done [#allocation3], 256
    $region45: #{tpu_custom_call.1} parent=1 // pred_fallthru
      _
    // Predicated region
    $region46: #{tpu_custom_call.1} parent=1 // pred_check
      _
    $region47: #{tpu_custom_call.1} parent=1 // pred_check_branch
      %83 = sbr.rel (0) target = $region49
    $region48: #{tpu_custom_call.1} parent=1 // pred_region
      %84 = dma.done [#allocation6], 256
    $region49: #{tpu_custom_call.1} parent=1 // pred_fallthru
      _
    // Predicated region
    $region50: #{tpu_custom_call.1} parent=1 // pred_check
      _
    $region51: #{tpu_custom_call.1} parent=1 // pred_check_branch
      %86 = sbr.rel (0) target = $region53
    $region52: #{tpu_custom_call.1} parent=1 // pred_region
      %87 = dma.done [#allocation6], 256
    $region53: #{tpu_custom_call.1} parent=1 // pred_fallthru
      _
    // Predicated region
    $region54: #{tpu_custom_call.1} parent=1 // pred_check
      _
    $region55: #{tpu_custom_call.1} parent=1 // pred_check_branch
      %89 = sbr.rel (0) target = $region57
    $region56: #{tpu_custom_call.1} parent=1 // pred_region
      %90 = dma.done [#allocation9], 256
    $region57: #{tpu_custom_call.1} parent=1 // pred_fallthru
      _
    %v91 = vld [vmem:[#allocation2] sm:$0xff]
    %v92 = vld [vmem:[#allocation2 + $0x8] sm:$0xff]
    %v93 = vld [vmem:[%s1] sm:$0xff]
    %v94 = vld [vmem:[%s1 + $0x8] sm:$0xff]
    %v95 = vld [vmem:[%s1 + $0x10] sm:$0xff]
    %v96 = vld [vmem:[%s1 + $0x18] sm:$0xff]
    %v97 = vld [vmem:[%s1 + $0x20] sm:$0xff]
    %v98 = vld [vmem:[%s1 + $0x28] sm:$0xff]
    %v99 = vld [vmem:[%s1 + $0x30] sm:$0xff]
    %v100 = vld [vmem:[%s1 + $0x38] sm:$0xff]
    %vm101 = vcmask 261120
    %v103 = vsel %vm101, %v91, 0
    %v106 = vsel %vm101, %v92, 0
    %108 = vmatprep.subr.mxu0 %v94
    %109 = vmatpush1.msra.mxu0 %v93
    %110 = vmatprep.subr.mxu0 %v96
    %111 = vmatpush1.msra.mxu0 %v95
    %112 = vmatprep.subr.mxu0 %v98
    %113 = vmatpush1.msra.mxu0 %v97
    %114 = vmatprep.subr.mxu0 %v100
    %115 = vmatpush1.msra.mxu0 %v99
    %116 = vmatprep.subr.mxu0 0.0
    %117 = vmatpush1.msra.mxu0 0.0
    %118 = vmatprep.subr.mxu0 0.0
    %119 = vmatpush1.msra.mxu0 0.0
    %120 = vmatprep.subr.mxu0 0.0
    %121 = vmatpush1.msra.mxu0 0.0
    %122 = vmatprep.subr.mxu0 0.0
    %123 = vmatpush1.msra.mxu0 0.0
    %124 = vmatprep.subr.mxu0 0.0
    %125 = vmatpush1.msra.mxu0 0.0
    %126 = vmatprep.subr.mxu0 0.0
    %127 = vmatpush1.msra.mxu0 0.0
    %128 = vmatprep.subr.mxu0 0.0
    %129 = vmatpush1.msra.mxu0 0.0
    %130 = vmatprep.subr.mxu0 0.0
    %131 = vmatpush1.msra.mxu0 0.0
    %132 = vmatprep.subr.mxu0 0.0
    %133 = vmatpush1.msra.mxu0 0.0
    %134 = vmatprep.subr.mxu0 0.0
    %135 = vmatpush1.msra.mxu0 0.0
    %136 = vmatprep.subr.mxu0 0.0
    %137 = vmatpush1.msra.mxu0 0.0
    %138 = vmatprep.subr.mxu0 0.0
    %139 = vmatpush1.msra.mxu0 0.0
    %140 = vmatprep.subr.mxu0 0.0
    %141 = vmatpush1.msra.mxu0 0.0
    %142 = vmatprep.subr.mxu0 0.0
    %143 = vmatpush1.msra.mxu0 0.0
    %144 = vmatprep.subr.mxu0 0.0
    %145 = vmatpush1.msra.mxu0 0.0
    %146 = vmatprep.subr.mxu0 0.0
    %147 = vmatpush1.msra.mxu0 0.0
    %148 = vmatprep.subr.mxu0 0.0
    %149 = vmatpush1.msra.mxu0 0.0
    %150 = vmatprep.subr.mxu0 0.0
    %151 = vmatpush1.msra.mxu0 0.0
    %152 = vmatprep.subr.mxu0 0.0
    %153 = vmatpush1.msra.mxu0 0.0
    %154 = vmatprep.subr.mxu0 0.0
    %155 = vmatpush1.msra.mxu0 0.0
    %156 = vmatprep.subr.mxu0 0.0
    %157 = vmatpush1.msra.mxu0 0.0
    %158 = vmatprep.subr.mxu0 0.0
    %159 = vmatpush1.msra.mxu0 0.0
    %160 = vmatprep.subr.mxu0 0.0
    %161 = vmatpush1.msra.mxu0 0.0
    %162 = vmatprep.subr.mxu0 0.0
    %163 = vmatpush1.msra.mxu0 0.0
    %164 = vmatprep.subr.mxu0 0.0
    %165 = vmatpush1.msra.mxu0 0.0
    %166 = vmatprep.subr.mxu0 0.0
    %167 = vmatpush1.msra.mxu0 0.0
    %168 = vmatprep.subr.mxu0 0.0
    %169 = vmatpush1.msra.mxu0 0.0
    %170 = vmatprep.subr.mxu0 0.0
    %171 = vmatpush1.msra.mxu0 0.0
    %172 = vmatprep.mubr.f32.mxu0 0.0
    %173 = vmatmul.mubr.f32.gmra.mrb[0].mxu0 %v103
    %v174 = vpop.f32.mrb[0].mxu0
    %v175 = vadd.f32 0.0, %v174
    %v176 = vpop.f32.mrb[0].mxu0
    %v177 = vadd.f32 0.0, %v176
    %178 = vmatprep.mubr.f32.mxu0 0.0
    %179 = vmatmul.mubr.f32.gmra.mrb[0].mxu0 %v106
    %v180 = vpop.f32.mrb[0].mxu0
    %v181 = vadd.f32 0.0, %v180
    %v182 = vpop.f32.mrb[0].mxu0
    %v183 = vadd.f32 0.0, %v182
    %184 = vdwg.mxu0
    %v185 = vld [vmem:[#allocation5] sm:$0xff]
    %v186 = vld [vmem:[#allocation5 + $0x8] sm:$0xff]
    %v187 = vld [vmem:[#allocation7] sm:$0xff]
    %v188 = vld [vmem:[#allocation7 + $0x8] sm:$0xff]
    %v189 = vmul.f32 %v175, %v185
    %v190 = vmul.f32 %v181, %v186
    %193 = vrot.lane.b32.xlu0 %v187, 32
    %v194 = vpop.permute.xlu0 %193
    %195 = vrot.lane.b32.xlu0 %v188, 32
    %v196 = vpop.permute.xlu0 %195
    %v199 = vmul.f32 %v175, %v194
    %v200 = vmul.f32 %v181, %v196
    %203 = vrot.lane.b32.xlu0 %v199, 96
    %v204 = vpop.permute.xlu0 %203
    %205 = vrot.lane.b32.xlu0 %v200, 96
    %v206 = vpop.permute.xlu0 %205
    %v209 = vadd.f32 %v189, %v204
    %v210 = vadd.f32 %v190, %v206
    %213 = vrot.lane.b32.xlu0 %v185, 64
    %v214 = vpop.permute.xlu0 %213
    %215 = vrot.lane.b32.xlu0 %v186, 64
    %v216 = vpop.permute.xlu0 %215
    %v219 = vmul.f32 %v175, %v214
    %v220 = vmul.f32 %v181, %v216
    %221 = vrot.lane.b32.xlu0 %v187, 96
    %v222 = vpop.permute.xlu0 %221
    %223 = vrot.lane.b32.xlu0 %v188, 96
    %v224 = vpop.permute.xlu0 %223
    %v227 = vmul.f32 %v175, %v222
    %v228 = vmul.f32 %v181, %v224
    %231 = vrot.lane.b32.xlu0 %v227, 96
    %v232 = vpop.permute.xlu0 %231
    %233 = vrot.lane.b32.xlu0 %v228, 96
    %v234 = vpop.permute.xlu0 %233
    %v237 = vadd.f32 %v219, %v232
    %v238 = vadd.f32 %v220, %v234
    %v239 = vld [vmem:[%s4] sm:$0xff]
    %v240 = vld [vmem:[%s4 + $0x8] sm:$0xff]
    %v241 = vld [vmem:[%s4 + $0x10] sm:$0xff]
    %v242 = vld [vmem:[%s4 + $0x18] sm:$0xff]
    %v243 = vld [vmem:[%s4 + $0x20] sm:$0xff]
    %v244 = vld [vmem:[%s4 + $0x28] sm:$0xff]
    %v245 = vld [vmem:[%s4 + $0x30] sm:$0xff]
    %v246 = vld [vmem:[%s4 + $0x38] sm:$0xff]
    %255 = vrot.lane.b32.xlu0 %v239, 64
    %v256 = vpop.permute.xlu0 %255
    %257 = vrot.lane.b32.xlu0 %v240, 64
    %v258 = vpop.permute.xlu0 %257
    %259 = vrot.lane.b32.xlu0 %v241, 64
    %v260 = vpop.permute.xlu0 %259
    %261 = vrot.lane.b32.xlu0 %v242, 64
    %v262 = vpop.permute.xlu0 %261
    %263 = vrot.lane.b32.xlu0 %v243, 64
    %v264 = vpop.permute.xlu0 %263
    %265 = vrot.lane.b32.xlu0 %v244, 64
    %v266 = vpop.permute.xlu0 %265
    %267 = vrot.lane.b32.xlu0 %v245, 64
    %v268 = vpop.permute.xlu0 %267
    %269 = vrot.lane.b32.xlu0 %v246, 64
    %v270 = vpop.permute.xlu0 %269
    %v279 = vmul.f32 %v237, %v256
    %v280 = vmul.f32 %v238, %v258
    %v281 = vmul.f32 %v237, %v260
    %v282 = vmul.f32 %v238, %v262
    %v283 = vmul.f32 %v237, %v264
    %v284 = vmul.f32 %v238, %v266
    %v285 = vmul.f32 %v237, %v268
    %v286 = vmul.f32 %v238, %v270
    %v287 = vld [vmem:[%s6] sm:$0xff]
    %v288 = vld [vmem:[%s6 + $0x8] sm:$0xff]
    %v289 = vld [vmem:[%s6 + $0x10] sm:$0xff]
    %v290 = vld [vmem:[%s6 + $0x18] sm:$0xff]
    %v291 = vld [vmem:[%s6 + $0x20] sm:$0xff]
    %v292 = vld [vmem:[%s6 + $0x28] sm:$0xff]
    %v293 = vld [vmem:[%s6 + $0x30] sm:$0xff]
    %v294 = vld [vmem:[%s6 + $0x38] sm:$0xff]
    %v295 = vmul.f32 %v177, %v287
    %v296 = vmul.f32 %v183, %v288
    %v297 = vmul.f32 %v177, %v289
    %v298 = vmul.f32 %v183, %v290
    %v299 = vmul.f32 %v177, %v291
    %v300 = vmul.f32 %v183, %v292
    %v301 = vmul.f32 %v177, %v293
    %v302 = vmul.f32 %v183, %v294
    %311 = vrot.lane.b32.xlu0 %v279, 64
    %v312 = vpop.permute.xlu0 %311
    %313 = vrot.lane.b32.xlu0 %v280, 64
    %v314 = vpop.permute.xlu0 %313
    %315 = vrot.lane.b32.xlu0 %v281, 64
    %v316 = vpop.permute.xlu0 %315
    %317 = vrot.lane.b32.xlu0 %v282, 64
    %v318 = vpop.permute.xlu0 %317
    %319 = vrot.lane.b32.xlu0 %v283, 64
    %v320 = vpop.permute.xlu0 %319
    %321 = vrot.lane.b32.xlu0 %v284, 64
    %v322 = vpop.permute.xlu0 %321
    %323 = vrot.lane.b32.xlu0 %v285, 64
    %v324 = vpop.permute.xlu0 %323
    %325 = vrot.lane.b32.xlu0 %v286, 64
    %v326 = vpop.permute.xlu0 %325
    %v328 = vsel %vm101, %v209, 0
    %v331 = vsel %vm101, %v210, 0
    %v333 = vsel %vm101, %v312, 0
    %v335 = vsel %vm101, %v314, 0
    %v337 = vsel %vm101, %v316, 0
    %v339 = vsel %vm101, %v318, 0
    %v341 = vsel %vm101, %v320, 0
    %v343 = vsel %vm101, %v322, 0
    %v345 = vsel %vm101, %v324, 0
    %v347 = vsel %vm101, %v326, 0
    %349 = vmatprep.subr.mxu0 0.0
    %350 = vmatpush1.xpose.msra.mxu0 %v333
    %351 = vmatprep.subr.mxu0 0.0
    %352 = vmatpush1.xpose.msra.mxu0 %v335
    %353 = vmatprep.subr.mxu0 0.0
    %354 = vmatpush1.xpose.msra.mxu0 %v337
    %355 = vmatprep.subr.mxu0 0.0
    %356 = vmatpush1.xpose.msra.mxu0 %v339
    %357 = vmatprep.subr.mxu0 0.0
    %358 = vmatpush1.xpose.msra.mxu0 %v341
    %359 = vmatprep.subr.mxu0 0.0
    %360 = vmatpush1.xpose.msra.mxu0 %v343
    %361 = vmatprep.subr.mxu0 0.0
    %362 = vmatpush1.xpose.msra.mxu0 %v345
    %363 = vmatprep.subr.mxu0 0.0
    %364 = vmatpush1.xpose.msra.mxu0 %v347
    %365 = vmatprep.subr.mxu0 0.0
    %366 = vmatpush1.xpose.msra.mxu0 0.0
    %367 = vmatprep.subr.mxu0 0.0
    %368 = vmatpush1.xpose.msra.mxu0 0.0
    %369 = vmatprep.subr.mxu0 0.0
    %370 = vmatpush1.xpose.msra.mxu0 0.0
    %371 = vmatprep.subr.mxu0 0.0
    %372 = vmatpush1.xpose.msra.mxu0 0.0
    %373 = vmatprep.subr.mxu0 0.0
    %374 = vmatpush1.xpose.msra.mxu0 0.0
    %375 = vmatprep.subr.mxu0 0.0
    %376 = vmatpush1.xpose.msra.mxu0 0.0
    %377 = vmatprep.subr.mxu0 0.0
    %378 = vmatpush1.xpose.msra.mxu0 0.0
    %379 = vmatprep.subr.mxu0 0.0
    %380 = vmatpush1.xpose.msra.mxu0 0.0
    %381 = vmatprep.subr.mxu0 0.0
    %382 = vmatpush1.xpose.msra.mxu0 0.0
    %383 = vmatprep.subr.mxu0 0.0
    %384 = vmatpush1.xpose.msra.mxu0 0.0
    %385 = vmatprep.subr.mxu0 0.0
    %386 = vmatpush1.xpose.msra.mxu0 0.0
    %387 = vmatprep.subr.mxu0 0.0
    %388 = vmatpush1.xpose.msra.mxu0 0.0
    %389 = vmatprep.subr.mxu0 0.0
    %390 = vmatpush1.xpose.msra.mxu0 0.0
    %391 = vmatprep.subr.mxu0 0.0
    %392 = vmatpush1.xpose.msra.mxu0 0.0
    %393 = vmatprep.subr.mxu0 0.0
    %394 = vmatpush1.xpose.msra.mxu0 0.0
    %395 = vmatprep.subr.mxu0 0.0
    %396 = vmatpush1.xpose.msra.mxu0 0.0
    %397 = vmatprep.subr.mxu0 0.0
    %398 = vmatpush1.xpose.msra.mxu0 0.0
    %399 = vmatprep.subr.mxu0 0.0
    %400 = vmatpush1.xpose.msra.mxu0 0.0
    %401 = vmatprep.subr.mxu0 0.0
    %402 = vmatpush1.xpose.msra.mxu0 0.0
    %403 = vmatprep.subr.mxu0 0.0
    %404 = vmatpush1.xpose.msra.mxu0 0.0
    %405 = vmatprep.subr.mxu0 0.0
    %406 = vmatpush1.xpose.msra.mxu0 0.0
    %407 = vmatprep.subr.mxu0 0.0
    %408 = vmatpush1.xpose.msra.mxu0 0.0
    %409 = vmatprep.subr.mxu0 0.0
    %410 = vmatpush1.xpose.msra.mxu0 0.0
    %411 = vmatprep.subr.mxu0 0.0
    %412 = vmatpush1.xpose.msra.mxu0 0.0
    %413 = vmatprep.mubr.f32.mxu0 0.0
    %414 = vmatmul.mubr.f32.gmra.mrb[0].mxu0 %v328
    %v415 = vpop.f32.mrb[0].mxu0
    %v416 = vadd.f32 0.0, %v415
    %v417 = vpop.f32.mrb[0].mxu0
    %418 = vmatprep.mubr.f32.mxu0 0.0
    %419 = vmatmul.mubr.f32.gmra.mrb[0].mxu0 %v331
    %v420 = vpop.f32.mrb[0].mxu0
    %v421 = vadd.f32 0.0, %v420
    %v422 = vpop.f32.mrb[0].mxu0
    %423 = vdwg.mxu0
    %v424 = vld [vmem:[#allocation8] sm:$0xff]
    %v425 = vld [vmem:[#allocation8 + $0x8] sm:$0xff]
    %v426 = vmul.f32 %v416, %v424
    %v427 = vmul.f32 %v421, %v425
    %vm428 = vcmask 523264
    %v430 = vsel %vm428, %v426, 0
    %v433 = vsel %vm428, %v427, 0
    %435 = vmatprep.subr.mxu0 0.0
    %436 = vmatpush1.msra.mxu0 %v295
    %437 = vmatprep.subr.mxu0 0.0
    %438 = vmatpush1.msra.mxu0 %v296
    %439 = vmatprep.subr.mxu0 0.0
    %440 = vmatpush1.msra.mxu0 %v297
    %441 = vmatprep.subr.mxu0 0.0
    %442 = vmatpush1.msra.mxu0 %v298
    %443 = vmatprep.subr.mxu0 0.0
    %444 = vmatpush1.msra.mxu0 %v299
    %445 = vmatprep.subr.mxu0 0.0
    %446 = vmatpush1.msra.mxu0 %v300
    %447 = vmatprep.subr.mxu0 0.0
    %448 = vmatpush1.msra.mxu0 %v301
    %449 = vmatprep.subr.mxu0 0.0
    %450 = vmatpush1.msra.mxu0 %v302
    %451 = vmatprep.subr.mxu0 0.0
    %452 = vmatpush1.msra.mxu0 0.0
    %453 = vmatprep.subr.mxu0 0.0
    %454 = vmatpush1.msra.mxu0 0.0
    %455 = vmatprep.subr.mxu0 0.0
    %456 = vmatpush1.msra.mxu0 0.0
    %457 = vmatprep.subr.mxu0 0.0
    %458 = vmatpush1.msra.mxu0 0.0
    %459 = vmatprep.subr.mxu0 0.0
    %460 = vmatpush1.msra.mxu0 0.0
    %461 = vmatprep.subr.mxu0 0.0
    %462 = vmatpush1.msra.mxu0 0.0
    %463 = vmatprep.subr.mxu0 0.0
    %464 = vmatpush1.msra.mxu0 0.0
    %465 = vmatprep.subr.mxu0 0.0
    %466 = vmatpush1.msra.mxu0 0.0
    %467 = vmatprep.subr.mxu0 0.0
    %468 = vmatpush1.msra.mxu0 0.0
    %469 = vmatprep.subr.mxu0 0.0
    %470 = vmatpush1.msra.mxu0 0.0
    %471 = vmatprep.subr.mxu0 0.0
    %472 = vmatpush1.msra.mxu0 0.0
    %473 = vmatprep.subr.mxu0 0.0
    %474 = vmatpush1.msra.mxu0 0.0
    %475 = vmatprep.subr.mxu0 0.0
    %476 = vmatpush1.msra.mxu0 0.0
    %477 = vmatprep.subr.mxu0 0.0
    %478 = vmatpush1.msra.mxu0 0.0
    %479 = vmatprep.subr.mxu0 0.0
    %480 = vmatpush1.msra.mxu0 0.0
    %481 = vmatprep.subr.mxu0 0.0
    %482 = vmatpush1.msra.mxu0 0.0
    %483 = vmatprep.subr.mxu0 0.0
    %484 = vmatpush1.msra.mxu0 0.0
    %485 = vmatprep.subr.mxu0 0.0
    %486 = vmatpush1.msra.mxu0 0.0
    %487 = vmatprep.subr.mxu0 0.0
    %488 = vmatpush1.msra.mxu0 0.0
    %489 = vmatprep.subr.mxu0 0.0
    %490 = vmatpush1.msra.mxu0 0.0
    %491 = vmatprep.subr.mxu0 0.0
    %492 = vmatpush1.msra.mxu0 0.0
    %493 = vmatprep.subr.mxu0 0.0
    %494 = vmatpush1.msra.mxu0 0.0
    %495 = vmatprep.subr.mxu0 0.0
    %496 = vmatpush1.msra.mxu0 0.0
    %497 = vmatprep.subr.mxu0 0.0
    %498 = vmatpush1.msra.mxu0 0.0
    %499 = vmatprep.mubr.f32.mxu0 0.0
    %500 = vmatmul.mubr.f32.gmra.mrb[0].mxu0 %v430
    %v501 = vpop.f32.mrb[0].mxu0
    %v502 = vadd.f32 0.0, %v501
    %v503 = vpop.f32.mrb[0].mxu0
    %504 = vmatprep.mubr.f32.mxu0 0.0
    %505 = vmatmul.mubr.f32.gmra.mrb[0].mxu0 %v433
    %v506 = vpop.f32.mrb[0].mxu0
    %v507 = vadd.f32 0.0, %v506
    %v508 = vpop.f32.mrb[0].mxu0
    %509 = vdwg.mxu0
    %v510 = vmul.f32 %v502, %v502
    %v511 = vmul.f32 %v507, %v507
    %v512 = vld [vmem:[%s7] sm:$0xff]
    %v513 = vld [vmem:[%s7 + $0x8] sm:$0xff]
    %v514 = vld [vmem:[%s7 + $0x10] sm:$0xff]
    %v515 = vld [vmem:[%s7 + $0x18] sm:$0xff]
    %v516 = vld [vmem:[%s7 + $0x20] sm:$0xff]
    %v517 = vld [vmem:[%s7 + $0x28] sm:$0xff]
    %v518 = vld [vmem:[%s7 + $0x30] sm:$0xff]
    %v519 = vld [vmem:[%s7 + $0x38] sm:$0xff]
    %v521 = vsel %vm428, %v510, 0
    %v524 = vsel %vm428, %v511, 0
    %526 = vmatprep.subr.mxu0 0.0
    %527 = vmatpush1.msra.mxu0 %v512
    %528 = vmatprep.subr.mxu0 0.0
    %529 = vmatpush1.msra.mxu0 %v513
    %530 = vmatprep.subr.mxu0 0.0
    %531 = vmatpush1.msra.mxu0 %v514
    %532 = vmatprep.subr.mxu0 0.0
    %533 = vmatpush1.msra.mxu0 %v515
    %534 = vmatprep.subr.mxu0 0.0
    %535 = vmatpush1.msra.mxu0 %v516
    %536 = vmatprep.subr.mxu0 0.0
    %537 = vmatpush1.msra.mxu0 %v517
    %538 = vmatprep.subr.mxu0 0.0
    %539 = vmatpush1.msra.mxu0 %v518
    %540 = vmatprep.subr.mxu0 0.0
    %541 = vmatpush1.msra.mxu0 %v519
    %542 = vmatprep.subr.mxu0 0.0
    %543 = vmatpush1.msra.mxu0 0.0
    %544 = vmatprep.subr.mxu0 0.0
    %545 = vmatpush1.msra.mxu0 0.0
    %546 = vmatprep.subr.mxu0 0.0
    %547 = vmatpush1.msra.mxu0 0.0
    %548 = vmatprep.subr.mxu0 0.0
    %549 = vmatpush1.msra.mxu0 0.0
    %550 = vmatprep.subr.mxu0 0.0
    %551 = vmatpush1.msra.mxu0 0.0
    %552 = vmatprep.subr.mxu0 0.0
    %553 = vmatpush1.msra.mxu0 0.0
    %554 = vmatprep.subr.mxu0 0.0
    %555 = vmatpush1.msra.mxu0 0.0
    %556 = vmatprep.subr.mxu0 0.0
    %557 = vmatpush1.msra.mxu0 0.0
    %558 = vmatprep.subr.mxu0 0.0
    %559 = vmatpush1.msra.mxu0 0.0
    %560 = vmatprep.subr.mxu0 0.0
    %561 = vmatpush1.msra.mxu0 0.0
    %562 = vmatprep.subr.mxu0 0.0
    %563 = vmatpush1.msra.mxu0 0.0
    %564 = vmatprep.subr.mxu0 0.0
    %565 = vmatpush1.msra.mxu0 0.0
    %566 = vmatprep.subr.mxu0 0.0
    %567 = vmatpush1.msra.mxu0 0.0
    %568 = vmatprep.subr.mxu0 0.0
    %569 = vmatpush1.msra.mxu0 0.0
    %570 = vmatprep.subr.mxu0 0.0
    %571 = vmatpush1.msra.mxu0 0.0
    %572 = vmatprep.subr.mxu0 0.0
    %573 = vmatpush1.msra.mxu0 0.0
    %574 = vmatprep.subr.mxu0 0.0
    %575 = vmatpush1.msra.mxu0 0.0
    %576 = vmatprep.subr.mxu0 0.0
    %577 = vmatpush1.msra.mxu0 0.0
    %578 = vmatprep.subr.mxu0 0.0
    %579 = vmatpush1.msra.mxu0 0.0
    %580 = vmatprep.subr.mxu0 0.0
    %581 = vmatpush1.msra.mxu0 0.0
    %582 = vmatprep.subr.mxu0 0.0
    %583 = vmatpush1.msra.mxu0 0.0
    %584 = vmatprep.subr.mxu0 0.0
    %585 = vmatpush1.msra.mxu0 0.0
    %586 = vmatprep.subr.mxu0 0.0
    %587 = vmatpush1.msra.mxu0 0.0
    %588 = vmatprep.subr.mxu0 0.0
    %589 = vmatpush1.msra.mxu0 0.0
    %590 = vmatprep.mubr.f32.mxu0 0.0
    %591 = vmatmul.mubr.f32.gmra.mrb[0].mxu0 %v521
    %v592 = vpop.f32.mrb[0].mxu0
    %v593 = vadd.f32 1e-05, %v592
    %v594 = vpop.f32.mrb[0].mxu0
    %595 = vmatprep.mubr.f32.mxu0 0.0
    %596 = vmatmul.mubr.f32.gmra.mrb[0].mxu0 %v524
    %v597 = vpop.f32.mrb[0].mxu0
    %v598 = vadd.f32 1e-05, %v597
    %v599 = vpop.f32.mrb[0].mxu0
    %600 = vdwg.mxu0
    %v601 = vrsqrt.pop %v593
    %v602 = vrsqrt.pop %v598
    %v603 = vmul.f32 %v502, %v601
    %v604 = vmul.f32 %v507, %v602
    %v605 = vld [vmem:[%s8] sm:$0x1]
    %v607 = vlaneseq
    %v608 = vshrl.u32 %v607, 7
    %v609 = vsub.s32 0, %v608
    %v610 = vrot.slane %v605, %v609
    %v612 = vmul.f32 %v603, %v610
    %v613 = vmul.f32 %v604, %v610
    %616 = vrot.lane.b32.xlu0 %v177, 64
    %v617 = vpop.permute.xlu0 %616
    %618 = vrot.lane.b32.xlu0 %v183, 64
    %v619 = vpop.permute.xlu0 %618
    %v622 = vmul.f32 %v612, %v617
    %v623 = vmul.f32 %v613, %v619
    %v624 = vxor.u32 %v177, 2147483648
    %v625 = vxor.u32 %v183, 2147483648
    %v626 = vmul.f32 %v624, 1.442695
    %v627 = vpow.pop %v626
    %v628 = vmul.f32 %v625, 1.442695
    %v629 = vpow.pop %v628
    %v630 = vadd.f32 %v627, 1.0
    %v631 = vadd.f32 %v629, 1.0
    %v632 = vrcp.pop %v630
    %v633 = vmul.f32 1.0, %v632
    %v634 = vrcp.pop %v631
    %v635 = vmul.f32 1.0, %v634
    %638 = vrot.lane.b32.xlu0 %v633, 64
    %v639 = vpop.permute.xlu0 %638
    %640 = vrot.lane.b32.xlu0 %v635, 64
    %v641 = vpop.permute.xlu0 %640
    %v644 = vmul.f32 %v622, %v639
    %v645 = vmul.f32 %v623, %v641
    %v646 = vld [vmem:[%s9] sm:$0xff]
    %v647 = vld [vmem:[%s9 + $0x8] sm:$0xff]
    %v648 = vld [vmem:[%s9 + $0x10] sm:$0xff]
    %v649 = vld [vmem:[%s9 + $0x18] sm:$0xff]
    %v650 = vld [vmem:[%s9 + $0x20] sm:$0xff]
    %v651 = vld [vmem:[%s9 + $0x28] sm:$0xff]
    %v652 = vld [vmem:[%s9 + $0x30] sm:$0xff]
    %v653 = vld [vmem:[%s9 + $0x38] sm:$0xff]
    %v655 = vsel %vm428, %v644, 0
    %v658 = vsel %vm428, %v645, 0
    %660 = vmatprep.subr.mxu0 0.0
    %661 = vmatpush1.msra.mxu0 %v646
    %662 = vmatprep.subr.mxu0 0.0
    %663 = vmatpush1.msra.mxu0 %v647
    %664 = vmatprep.subr.mxu0 0.0
    %665 = vmatpush1.msra.mxu0 %v648
    %666 = vmatprep.subr.mxu0 0.0
    %667 = vmatpush1.msra.mxu0 %v649
    %668 = vmatprep.subr.mxu0 0.0
    %669 = vmatpush1.msra.mxu0 %v650
    %670 = vmatprep.subr.mxu0 0.0
    %671 = vmatpush1.msra.mxu0 %v651
    %672 = vmatprep.subr.mxu0 0.0
    %673 = vmatpush1.msra.mxu0 %v652
    %674 = vmatprep.subr.mxu0 0.0
    %675 = vmatpush1.msra.mxu0 %v653
    %676 = vmatprep.subr.mxu0 0.0
    %677 = vmatpush1.msra.mxu0 0.0
    %678 = vmatprep.subr.mxu0 0.0
    %679 = vmatpush1.msra.mxu0 0.0
    %680 = vmatprep.subr.mxu0 0.0
    %681 = vmatpush1.msra.mxu0 0.0
    %682 = vmatprep.subr.mxu0 0.0
    %683 = vmatpush1.msra.mxu0 0.0
    %684 = vmatprep.subr.mxu0 0.0
    %685 = vmatpush1.msra.mxu0 0.0
    %686 = vmatprep.subr.mxu0 0.0
    %687 = vmatpush1.msra.mxu0 0.0
    %688 = vmatprep.subr.mxu0 0.0
    %689 = vmatpush1.msra.mxu0 0.0
    %690 = vmatprep.subr.mxu0 0.0
    %691 = vmatpush1.msra.mxu0 0.0
    %692 = vmatprep.subr.mxu0 0.0
    %693 = vmatpush1.msra.mxu0 0.0
    %694 = vmatprep.subr.mxu0 0.0
    %695 = vmatpush1.msra.mxu0 0.0
    %696 = vmatprep.subr.mxu0 0.0
    %697 = vmatpush1.msra.mxu0 0.0
    %698 = vmatprep.subr.mxu0 0.0
    %699 = vmatpush1.msra.mxu0 0.0
    %700 = vmatprep.subr.mxu0 0.0
    %701 = vmatpush1.msra.mxu0 0.0
    %702 = vmatprep.subr.mxu0 0.0
    %703 = vmatpush1.msra.mxu0 0.0
    %704 = vmatprep.subr.mxu0 0.0
    %705 = vmatpush1.msra.mxu0 0.0
    %706 = vmatprep.subr.mxu0 0.0
    %707 = vmatpush1.msra.mxu0 0.0
    %708 = vmatprep.subr.mxu0 0.0
    %709 = vmatpush1.msra.mxu0 0.0
    %710 = vmatprep.subr.mxu0 0.0
    %711 = vmatpush1.msra.mxu0 0.0
    %712 = vmatprep.subr.mxu0 0.0
    %713 = vmatpush1.msra.mxu0 0.0
    %714 = vmatprep.subr.mxu0 0.0
    %715 = vmatpush1.msra.mxu0 0.0
    %716 = vmatprep.subr.mxu0 0.0
    %717 = vmatpush1.msra.mxu0 0.0
    %718 = vmatprep.subr.mxu0 0.0
    %719 = vmatpush1.msra.mxu0 0.0
    %720 = vmatprep.subr.mxu0 0.0
    %721 = vmatpush1.msra.mxu0 0.0
    %722 = vmatprep.subr.mxu0 0.0
    %723 = vmatpush1.msra.mxu0 0.0
    %724 = vmatprep.mubr.f32.mxu0 0.0
    %725 = vmatmul.mubr.f32.gmra.mrb[0].mxu0 %v655
    %v726 = vpop.f32.mrb[0].mxu0
    %v727 = vadd.f32 0.0, %v726
    %v728 = vpop.f32.mrb[0].mxu0
    %729 = vmatprep.mubr.f32.mxu0 0.0
    %730 = vmatmul.mubr.f32.gmra.mrb[0].mxu0 %v658
    %v731 = vpop.f32.mrb[0].mxu0
    %v732 = vadd.f32 0.0, %v731
    %v733 = vpop.f32.mrb[0].mxu0
    %734 = vdwg.mxu0
    %735 = vst.msk [vmem:[#allocation10] sm:$0xff] %vm101, %v727
    %736 = vst.msk [vmem:[#allocation10 + $0x8] sm:$0xff] %vm101, %v732
    // Predicated region
    $region58: #{tpu_custom_call.1} parent=1 // pred_check
      _
    $region59: #{tpu_custom_call.1} parent=1 // pred_check_branch
      %738 = sbr.rel (0) target = $region61
    $region60: #{tpu_custom_call.1} parent=1 // pred_region
      %s740 = ssub.s32 256, 256
      %741 = vsyncadd [#allocation4], %s740
      %s742 = sshll.u32 [#allocation10], 4
      %s743 = int_to_ptr.vmem [resolvable:$true] %s742
      %748 = dma.vmem_to_hbm [thread:$0]  %s743, 256, %s10, [#allocation4], 128, 128, 8
    $region61: #{tpu_custom_call.1} parent=1 // pred_fallthru
      _
    // Predicated region
    $region62: #{tpu_custom_call.1} parent=1 // pred_check
      _
    $region63: #{tpu_custom_call.1} parent=1 // pred_check_branch
      %750 = sbr.rel (0) target = $region65
    $region64: #{tpu_custom_call.1} parent=1 // pred_region
      %751 = dma.done [#allocation4], 256
    $region65: #{tpu_custom_call.1} parent=1 // pred_fallthru
      _
    %752 = vsyncpa [#allocation3], 1
    %753 = vsyncpa [#allocation6], 1
    %754 = vsyncpa [#allocation9], 1
    %755 = vsyncpa [#allocation4], 1

</llo_original>
